<compile_context>
chip_gen: v6e
topology: v6e:2x2x1
jax: 0.10.0
libtpu: 0.0.40
codegen_flags: <defaults>
</compile_context>

<pallas_src>
import jax
import jax.numpy as jnp
from jax.experimental import pallas as pl
from jax.experimental.pallas import tpu as pltpu

WORLD_SIZE = 4


def _round_up(a: int, b: int) -> int:
    return ((a + b - 1) // b) * b


def _vmem_limit_bytes() -> int:
    """Generation-aware scoped-VMEM limit (~75% of per-core capacity)."""
    try:
        cap = int(pltpu.get_tpu_info().vmem_capacity_bytes)
    except Exception:
        cap = 64 * 1024 * 1024            # conservative fallback (v7x per-TC)
    return int(min((cap * 3) // 4, 100 * 1024 * 1024))


def _choose_tn(part_inter: int, target: int) -> int:
    """Largest multiple of 128 <= target that divides part_inter (else full)."""
    cand = (min(target, part_inter) // 128) * 128
    while cand >= 128:
        if part_inter % cand == 0:
            return cand
        cand -= 128
    return part_inter


def _choose_tm(M: int, target: int) -> int:
    if M <= target:
        return max(8, _round_up(M, 8))
    # Prefer multiples of 256 (v6e/v7x MXU width) that minimize row padding.
    best, best_pad = 256, _round_up(M, 256) - M
    for cand in range(256, target + 1, 256):
        pad = _round_up(M, cand) - M
        if pad <= best_pad:
            best, best_pad = cand, pad
    return best


def _vmem_footprint(tm: int, tn: int, dim: int, n_chunks: int) -> int:
    wbuf = 1 if n_chunks == 1 else 2      # weight buffering depth
    x_b = 2 * tm * dim * 4                # f32 input, double-buffered
    w_b = wbuf * 3 * (dim * tn) * 2       # w1 + w3 + w2 chunks, bf16
    o_b = 2 * tm * dim * 2                # bf16 output, double-buffered
    a_b = tm * dim * 4                    # f32 accumulator scratch
    return x_b + w_b + o_b + a_b


def mlp_kernel(x_ref, w1_ref, w3_ref, w2_ref, o_ref, acc_ref):
    # x_ref:   (tm, dim)  f32   -- row tile of activations (resident across n)
    # w1_ref:  (dim, tn)  bf16  -- pre-transposed w1 chunk
    # w3_ref:  (dim, tn)  bf16  -- pre-transposed w3 chunk
    # w2_ref:  (tn, dim)  bf16  -- pre-transposed w2 chunk
    # o_ref:   (tm, dim)  bf16
    # acc_ref: (tm, dim)  f32   -- VMEM accumulator across inter-dim chunks
    n = pl.program_id(1)

    @pl.when(n == 0)
    def _():
        acc_ref[...] = jnp.zeros_like(acc_ref)

    x = x_ref[...].astype(jnp.bfloat16)   # in-kernel cast; hidden under the MXU

    # Gate projections for this inter-dim chunk; f32 accumulation on the MXU.
    h1 = jnp.dot(x, w1_ref[...], preferred_element_type=jnp.float32)
    h3 = jnp.dot(x, w3_ref[...], preferred_element_type=jnp.float32)

    # SiLU(h1) * h3 in f32 (v5e has no bf16 VPU/EUP); sigmoid's exp -> EUP slot.
    gated = (h1 * jax.nn.sigmoid(h1)) * h3

    # Down-projection chunk, accumulated in f32.
    acc_ref[...] += jnp.dot(gated.astype(jnp.bfloat16), w2_ref[...],
                            preferred_element_type=jnp.float32)

    @pl.when(n == pl.num_programs(1) - 1)
    def _():
        o_ref[...] = acc_ref[...].astype(o_ref.dtype)


def _weight_spec(block_shape, index_map, single_buffer: bool) -> pl.BlockSpec:
    if single_buffer:
        # Constant block index -> one resident copy is enough (halves weight VMEM).
        try:
            return pl.BlockSpec(block_shape, index_map,
                                pipeline_mode=pl.Buffered(1))
        except TypeError:
            pass
    return pl.BlockSpec(block_shape, index_map)


def mlp_forward(x, w1, w3, w2, *, tm_target: int = 768, tn_target: int = 512):
    """x: (B, S, dim) f32; w1/w3: (part_inter, dim); w2: (dim, part_inter)."""
    B, S, dim = x.shape
    part_inter = w1.shape[0]
    M = B * S

    vmem_limit = _vmem_limit_bytes()

    tn = _choose_tn(part_inter, tn_target)
    tm = _choose_tm(M, tm_target)
    n_chunks = part_inter // tn

    # Shrink tiles until the per-TensorCore VMEM budget is respected
    # (v7x: 64 MiB/TC -> ~48 MiB scoped; v5e/v6e: 128 MiB -> ~96 MiB).
    budget = int(0.85 * vmem_limit)
    while _vmem_footprint(tm, tn, dim, n_chunks) > budget:
        if tm > 256:
            tm -= 256
        elif tn > 128 and tn % 256 == 0:
            tn //= 2
            n_chunks = part_inter // tn
        elif tm > 8:
            tm = max(8, ((tm // 2) + 7) // 8 * 8)
        else:
            break

    Mp = _round_up(M, tm)
    num_m_tiles = Mp // tm

    x2d = x.reshape(M, dim)
    if Mp != M:
        x2d = jnp.pad(x2d, ((0, Mp - M), (0, 0)))

    # One-time wrapper-side weight prep: pre-transpose (no in-kernel XLU
    # transpose) and cast to bf16 for the MXU.  w1/w3 stay separate so the
    # gate halves pair correctly under inter-dim chunking.
    w1_t = w1.T.astype(jnp.bfloat16)      # (dim, part_inter)
    w3_t = w3.T.astype(jnp.bfloat16)      # (dim, part_inter)
    w2_t = w2.T.astype(jnp.bfloat16)      # (part_inter, dim)

    grid = (num_m_tiles, n_chunks)
    single_buffer_weights = (n_chunks == 1)

    # Honest cost hint: streamed weights are re-read once per M tile.
    weight_bytes = (w1_t.size + w3_t.size + w2_t.size) * 2
    weight_reads = num_m_tiles if n_chunks > 1 else 1
    flops = 6 * Mp * dim * part_inter
    bytes_accessed = (Mp * dim * 4                      # x (f32)
                      + weight_bytes * weight_reads     # streamed weights
                      + Mp * dim * 2)                   # y (bf16)
    cost = pl.CostEstimate(flops=flops,
                           transcendentals=Mp * part_inter,
                           bytes_accessed=bytes_accessed)

    out = pl.pallas_call(
        mlp_kernel,
        out_shape=jax.ShapeDtypeStruct((Mp, dim), jnp.bfloat16),
        grid_spec=pltpu.PrefetchScalarGridSpec(
            num_scalar_prefetch=0,
            grid=grid,
            in_specs=[
                # x: resident across the inter-dim axis, streams over M tiles.
                pl.BlockSpec((tm, dim), lambda i, n: (i, 0)),
                _weight_spec((dim, tn), lambda i, n: (0, n), single_buffer_weights),
                _weight_spec((dim, tn), lambda i, n: (0, n), single_buffer_weights),
                _weight_spec((tn, dim), lambda i, n: (n, 0), single_buffer_weights),
            ],
            out_specs=pl.BlockSpec((tm, dim), lambda i, n: (i, 0)),
            scratch_shapes=[pltpu.VMEM((tm, dim), jnp.float32)],
        ),
        compiler_params=pltpu.CompilerParams(
            # M tiles are independent (v7x: sharded over its 2 TCs); the
            # inter-dim axis carries the accumulator -> "arbitrary".
            dimension_semantics=("parallel", "arbitrary"),
            vmem_limit_bytes=vmem_limit,
        ),
        cost_estimate=cost,
    )(x2d, w1_t, w3_t, w2_t)

    return out[:M].reshape(B, S, dim)


def xavier_normal(key, out_features, in_features):
    # Matches torch.nn.init.xavier_normal_: std = sqrt(2 / (fan_in + fan_out))
    std = (2.0 / (in_features + out_features)) ** 0.5
    return std * jax.random.normal(key, (out_features, in_features), dtype=jnp.float32)


def mlp_reference(x, w1, w3, w2):
    """Pure-JAX reference mirroring the kernel's bf16 casts (f32 accumulation)."""
    B, S, dim = x.shape
    hp = jax.lax.Precision.HIGHEST
    x2 = x.reshape(-1, dim).astype(jnp.bfloat16).astype(jnp.float32)
    w1f = w1.astype(jnp.bfloat16).astype(jnp.float32)
    w3f = w3.astype(jnp.bfloat16).astype(jnp.float32)
    w2f = w2.astype(jnp.bfloat16).astype(jnp.float32)
    h1 = jnp.dot(x2, w1f.T, precision=hp)
    h3 = jnp.dot(x2, w3f.T, precision=hp)
    gated = (h1 * jax.nn.sigmoid(h1)) * h3
    gated = gated.astype(jnp.bfloat16).astype(jnp.float32)
    y = jnp.dot(gated, w2f.T, precision=hp)
    return y.reshape(B, S, dim)


if __name__ == "__main__":
    # Small shapes consistent with the module:
    #   dim = 128, inter_dim = 512 (divisible by world_size=4 -> part_inter = 128)
    #   x: (batch=2, seq=8, dim=128)
    dim = 128
    inter_dim = 512
    part_inter = inter_dim // WORLD_SIZE
    B, S = 2, 8

    key = jax.random.PRNGKey(0)
    kx, k1, k2, k3 = jax.random.split(key, 4)

    x = jax.random.normal(kx, (B, S, dim), dtype=jnp.float32)
    w1 = xavier_normal(k1, part_inter, dim)   # ColumnParallel shard of w1
    w3 = xavier_normal(k3, part_inter, dim)   # ColumnParallel shard of w3
    w2 = xavier_normal(k2, dim, part_inter)   # RowParallel shard of w2

    out = mlp_forward(x, w1, w3, w2)
    out = jax.block_until_ready(out)

    ref = mlp_reference(x, w1, w3, w2)
    ref_bf = ref.astype(jnp.bfloat16).astype(jnp.float32)
    assert out.shape == (B, S, dim)
    assert out.dtype == jnp.bfloat16
    out_f32 = out.astype(jnp.float32)
    max_err = float(jnp.max(jnp.abs(out_f32 - ref_bf)))
    assert jnp.allclose(out_f32, ref_bf, atol=2e-2, rtol=2e-2), max_err

    print("KERNEL_OK")
</pallas_src>

<mosaic_0001>
module attributes {stable_mosaic.version = 11 : i64} {
  func.func @mlp_kernel(%arg0: i32, %arg1: i32, %arg2: memref<16x128xf32, #tpu.memory_space<vmem>>, %arg3: memref<128x128xbf16, #tpu.memory_space<vmem>>, %arg4: memref<128x128xbf16, #tpu.memory_space<vmem>>, %arg5: memref<128x128xbf16, #tpu.memory_space<vmem>>, %arg6: memref<16x128xbf16, #tpu.memory_space<vmem>>, %arg7: memref<16x128xf32, #tpu.memory_space<vmem>>) attributes {dimension_semantics = [#tpu.dimension_semantics<parallel>, #tpu.dimension_semantics<arbitrary>], iteration_bounds = array<i64: 1, 1>, scalar_prefetch = 0 : i64, scratch_operands = 1 : i64, tpu.core_type = #tpu.core_type<tc>, window_params = [{transform_indices = @transform_0, window_bounds = array<i64: 16, 128>}, {pipeline_mode = #tpu.pipeline_mode<synchronous>, transform_indices = @transform_1, window_bounds = array<i64: 128, 128>}, {pipeline_mode = #tpu.pipeline_mode<synchronous>, transform_indices = @transform_2, window_bounds = array<i64: 128, 128>}, {pipeline_mode = #tpu.pipeline_mode<synchronous>, transform_indices = @transform_3, window_bounds = array<i64: 128, 128>}, {transform_indices = @transform_4, window_bounds = array<i64: 16, 128>}]} {
    %c0_i32 = arith.constant 0 : i32
    %0 = arith.cmpi eq, %arg1, %c0_i32 : i32
    %1 = arith.extui %0 : i1 to i32
    %c0_i32_0 = arith.constant 0 : i32
    %2 = arith.cmpi ne, %1, %c0_i32_0 : i32
    scf.if %2 {
      %cst_17 = arith.constant 0.000000e+00 : f32
      %25 = vector.broadcast %cst_17 : f32 to vector<16x128xf32>
      %c0_18 = arith.constant 0 : index
      %c0_19 = arith.constant 0 : index
      %26 = vector.load %arg7[%c0_18, %c0_19] : memref<16x128xf32, #tpu.memory_space<vmem>>, vector<16x128xf32>
      tpu.vector_store %arg7[%c0_18, %c0_19], %25 {strides = array<i32>} : memref<16x128xf32, #tpu.memory_space<vmem>>, vector<16x128xf32>,
    } else {
    }
    %c0 = arith.constant 0 : index
    %c0_1 = arith.constant 0 : index
    %3 = vector.load %arg2[%c0, %c0_1] : memref<16x128xf32, #tpu.memory_space<vmem>>, vector<16x128xf32>
    %4 = arith.truncf %3 : vector<16x128xf32> to vector<16x128xbf16>
    %c0_2 = arith.constant 0 : index
    %c0_3 = arith.constant 0 : index
    %5 = vector.load %arg3[%c0_2, %c0_3] : memref<128x128xbf16, #tpu.memory_space<vmem>>, vector<128x128xbf16>
    %cst = arith.constant dense<0.000000e+00> : vector<16x128xf32>
    %6 = tpu.matmul %4, %5, %cst {dimension_numbers = #tpu.dot_dimension_numbers<[1], [0], [0], [1], [0, 0, 1, 1], [], []>} : vector<16x128xbf16>, vector<128x128xbf16>, vector<16x128xf32> -> vector<16x128xf32>
    %c0_4 = arith.constant 0 : index
    %c0_5 = arith.constant 0 : index
    %7 = vector.load %arg4[%c0_4, %c0_5] : memref<128x128xbf16, #tpu.memory_space<vmem>>, vector<128x128xbf16>
    %cst_6 = arith.constant dense<0.000000e+00> : vector<16x128xf32>
    %8 = tpu.matmul %4, %7, %cst_6 {dimension_numbers = #tpu.dot_dimension_numbers<[1], [0], [0], [1], [0, 0, 1, 1], [], []>} : vector<16x128xbf16>, vector<128x128xbf16>, vector<16x128xf32> -> vector<16x128xf32>
    %9 = arith.negf %6 : vector<16x128xf32>
    %10 = math.exp %9 : vector<16x128xf32>
    %cst_7 = arith.constant 1.000000e+00 : f32
    %11 = vector.broadcast %cst_7 : f32 to vector<16x128xf32>
    %12 = arith.addf %11, %10 : vector<16x128xf32>
    %13 = arith.divf %11, %12 : vector<16x128xf32>
    %14 = arith.mulf %6, %13 : vector<16x128xf32>
    %15 = arith.mulf %14, %8 : vector<16x128xf32>
    %c0_8 = arith.constant 0 : index
    %c0_9 = arith.constant 0 : index
    %16 = vector.load %arg7[%c0_8, %c0_9] : memref<16x128xf32, #tpu.memory_space<vmem>>, vector<16x128xf32>
    %17 = arith.truncf %15 : vector<16x128xf32> to vector<16x128xbf16>
    %c0_10 = arith.constant 0 : index
    %c0_11 = arith.constant 0 : index
    %18 = vector.load %arg5[%c0_10, %c0_11] : memref<128x128xbf16, #tpu.memory_space<vmem>>, vector<128x128xbf16>
    %cst_12 = arith.constant dense<0.000000e+00> : vector<16x128xf32>
    %19 = tpu.matmul %17, %18, %cst_12 {dimension_numbers = #tpu.dot_dimension_numbers<[1], [0], [0], [1], [0, 0, 1, 1], [], []>} : vector<16x128xbf16>, vector<128x128xbf16>, vector<16x128xf32> -> vector<16x128xf32>
    %20 = arith.addf %16, %19 : vector<16x128xf32>
    %c0_13 = arith.constant 0 : index
    %c0_14 = arith.constant 0 : index
    %21 = vector.load %arg7[%c0_13, %c0_14] : memref<16x128xf32, #tpu.memory_space<vmem>>, vector<16x128xf32>
    tpu.vector_store %arg7[%c0_13, %c0_14], %20 {strides = array<i32>} : memref<16x128xf32, #tpu.memory_space<vmem>>, vector<16x128xf32>,
    %c0_i32_15 = arith.constant 0 : i32
    %22 = arith.cmpi eq, %arg1, %c0_i32_15 : i32
    %23 = arith.extui %22 : i1 to i32
    %c0_i32_16 = arith.constant 0 : i32
    %24 = arith.cmpi ne, %23, %c0_i32_16 : i32
    scf.if %24 {
      %c0_17 = arith.constant 0 : index
      %c0_18 = arith.constant 0 : index
      %25 = vector.load %arg7[%c0_17, %c0_18] : memref<16x128xf32, #tpu.memory_space<vmem>>, vector<16x128xf32>
      %26 = arith.truncf %25 : vector<16x128xf32> to vector<16x128xbf16>
      %c0_19 = arith.constant 0 : index
      %c0_20 = arith.constant 0 : index
      %27 = vector.load %arg6[%c0_19, %c0_20] : memref<16x128xbf16, #tpu.memory_space<vmem>>, vector<16x128xbf16>
      tpu.vector_store %arg6[%c0_19, %c0_20], %26 {strides = array<i32>} : memref<16x128xbf16, #tpu.memory_space<vmem>>, vector<16x128xbf16>,
    } else {
    }
    return
  }
  func.func @transform_0(%arg0: i32, %arg1: i32) -> (i32, i32) {
    %c0_i32 = arith.constant 0 : i32
    %c0_i32_0 = arith.constant 0 : i32
    return %arg0, %c0_i32 : i32, i32
  }
  func.func @transform_1(%arg0: i32, %arg1: i32) -> (i32, i32) {
    %c0_i32 = arith.constant 0 : i32
    %c0_i32_0 = arith.constant 0 : i32
    return %c0_i32, %arg1 : i32, i32
  }
  func.func @transform_2(%arg0: i32, %arg1: i32) -> (i32, i32) {
    %c0_i32 = arith.constant 0 : i32
    %c0_i32_0 = arith.constant 0 : i32
    return %c0_i32, %arg1 : i32, i32
  }
  func.func @transform_3(%arg0: i32, %arg1: i32) -> (i32, i32) {
    %c0_i32 = arith.constant 0 : i32
    %c0_i32_0 = arith.constant 0 : i32
    return %arg1, %c0_i32 : i32, i32
  }
  func.func @transform_4(%arg0: i32, %arg1: i32) -> (i32, i32) {
    %c0_i32 = arith.constant 0 : i32
    %c0_i32_0 = arith.constant 0 : i32
    return %arg0, %c0_i32 : i32, i32
  }
}

</mosaic_0001>

<llo_original>
// kernel: tpu_custom_call.1
$region0: #{tpu_custom_call.1}
  #allocation0 [shape = 'u32[]', space=smem, size = 0x4, offset = 0x4, fixed_abs, tag = 'smem constant byte address 0x4 - core index']
  #allocation1 [shape = 'u32[144,128]{1,0:T(1,128)}', space=vmem, size = 0x12000, scoped, tag = 'internal scratch']
  #allocation2 [shape = 'f32[16,128]{1,0:T(8,128)}', space=vmem, size = 0x2000, scoped, tag = 'scratch operand']
  %s0 = inlined_call_operand.hbm [shape: f32[16,128], index: 0, kind: input, shape index: {}]
  %s1 = inlined_call_operand.hbm [shape: bf16[128,128], index: 1, kind: input, shape index: {}]
  %s2 = inlined_call_operand.hbm [shape: bf16[128,128], index: 2, kind: input, shape index: {}]
  %s3 = inlined_call_operand.hbm [shape: bf16[128,128], index: 3, kind: input, shape index: {}]
  %s4 = inlined_call_operand.hbm [shape: bf16[16,128], index: 4, kind: output, shape index: {}]
  %s5 = sld [smem:[#allocation0]]
  $region50: #{tpu_custom_call.1} parent=0
    _
  %s7 = ssub.s32 1, %s5
  %s8 = scalar_select 0, %s7, %s5
  $region1: #{tpu_custom_call.1} parent=0
    #allocation3 [shape = 'u8[8192]{0}', space=vmem, size = 0x2000, scoped, tag = 'input window, operand 0, single buffered']
    #allocation4 [shape = 's32[1]{0}', space=sflag, size = 0x4, scoped, tag = 'scoped memory for tpu_custom_call.1']
    #allocation5 [shape = 's32[1]{0}', space=sflag, size = 0x4, scoped, tag = 'scoped memory for tpu_custom_call.1']
    #allocation6 [shape = 'u8[32768]{0}', space=vmem, size = 0x8000, scoped, tag = 'input window, operand 1, single buffered']
    #allocation7 [shape = 's32[1]{0}', space=sflag, size = 0x4, scoped, tag = 'scoped memory for tpu_custom_call.1']
    #allocation8 [shape = 'u8[32768]{0}', space=vmem, size = 0x8000, scoped, tag = 'input window, operand 2, single buffered']
    #allocation9 [shape = 'u8[32768]{0}', space=vmem, size = 0x8000, scoped, tag = 'input window, operand 3, single buffered']
    #allocation10 [shape = 's32[1]{0}', space=sflag, size = 0x4, scoped, tag = 'scoped memory for tpu_custom_call.1']
    #allocation11 [shape = 'u8[4096]{0}', space=vmem, size = 0x1000, scoped, tag = 'output window, operand 0, single buffered']
    %9 = vsyncpa [#allocation4], 0
    %10 = vsyncpa [#allocation7], 0
    %11 = vsyncpa [#allocation10], 0
    %12 = vsyncpa [#allocation5], 0
    // Predicated region
    $region2: #{tpu_custom_call.1} parent=1 // pred_check
      _
    $region3: #{tpu_custom_call.1} parent=1 // pred_check_branch
      %14 = sbr.rel (0) target = $region5
    $region4: #{tpu_custom_call.1} parent=1 // pred_region
      %s16 = ssub.s32 256, 256
      %17 = vsyncadd [#allocation4], %s16
      %s18 = sshll.u32 [#allocation3], 4
      %s19 = int_to_ptr.vmem [resolvable:$true] %s18
      %24 = dma.hbm_to_vmem [thread:$0]  %s0, 256, %s19, [#allocation4], 128, 128, 8
    $region5: #{tpu_custom_call.1} parent=1 // pred_fallthru
      _
    // Predicated region
    $region6: #{tpu_custom_call.1} parent=1 // pred_check
      _
    $region7: #{tpu_custom_call.1} parent=1 // pred_check_branch
      %26 = sbr.rel (0) target = $region9
    $region8: #{tpu_custom_call.1} parent=1 // pred_region
      %s28 = ssub.s32 1024, 1024
      %29 = vsyncadd [#allocation7], %s28
      %s30 = sshll.u32 [#allocation6], 4
      %s31 = int_to_ptr.vmem [resolvable:$true] %s30
      %36 = dma.hbm_to_vmem [thread:$0]  %s1, 1024, %s31, [#allocation7], 64, 64, 4
    $region9: #{tpu_custom_call.1} parent=1 // pred_fallthru
      _
    // Predicated region
    $region10: #{tpu_custom_call.1} parent=1 // pred_check
      _
    $region11: #{tpu_custom_call.1} parent=1 // pred_check_branch
      %38 = sbr.rel (0) target = $region13
    $region12: #{tpu_custom_call.1} parent=1 // pred_region
      %s40 = ssub.s32 1024, 1024
      %41 = vsyncadd [#allocation7], %s40
      %s42 = sshll.u32 [#allocation8], 4
      %s43 = int_to_ptr.vmem [resolvable:$true] %s42
      %48 = dma.hbm_to_vmem [thread:$0]  %s2, 1024, %s43, [#allocation7], 64, 64, 4
    $region13: #{tpu_custom_call.1} parent=1 // pred_fallthru
      _
    // Predicated region
    $region14: #{tpu_custom_call.1} parent=1 // pred_check
      _
    $region15: #{tpu_custom_call.1} parent=1 // pred_check_branch
      %50 = sbr.rel (0) target = $region17
    $region16: #{tpu_custom_call.1} parent=1 // pred_region
      %s52 = ssub.s32 1024, 1024
      %53 = vsyncadd [#allocation10], %s52
      %s54 = sshll.u32 [#allocation9], 4
      %s55 = int_to_ptr.vmem [resolvable:$true] %s54
      %60 = dma.hbm_to_vmem [thread:$0]  %s3, 1024, %s55, [#allocation10], 64, 64, 4
    $region17: #{tpu_custom_call.1} parent=1 // pred_fallthru
      _
    // Predicated region
    $region18: #{tpu_custom_call.1} parent=1 // pred_check
      _
    $region19: #{tpu_custom_call.1} parent=1 // pred_check_branch
      %62 = sbr.rel (0) target = $region21
    $region20: #{tpu_custom_call.1} parent=1 // pred_region
      %63 = dma.done [#allocation4], 256
    $region21: #{tpu_custom_call.1} parent=1 // pred_fallthru
      _
    // Predicated region
    $region22: #{tpu_custom_call.1} parent=1 // pred_check
      _
    $region23: #{tpu_custom_call.1} parent=1 // pred_check_branch
      %65 = sbr.rel (0) target = $region25
    $region24: #{tpu_custom_call.1} parent=1 // pred_region
      %66 = dma.done [#allocation7], 1024
    $region25: #{tpu_custom_call.1} parent=1 // pred_fallthru
      _
    // Predicated region
    $region26: #{tpu_custom_call.1} parent=1 // pred_check
      _
    $region27: #{tpu_custom_call.1} parent=1 // pred_check_branch
      %68 = sbr.rel (0) target = $region29
    $region28: #{tpu_custom_call.1} parent=1 // pred_region
      %69 = dma.done [#allocation7], 1024
    $region29: #{tpu_custom_call.1} parent=1 // pred_fallthru
      _
    // Predicated region
    $region30: #{tpu_custom_call.1} parent=1 // pred_check
      _
    $region31: #{tpu_custom_call.1} parent=1 // pred_check_branch
      %71 = sbr.rel (0) target = $region33
    $region32: #{tpu_custom_call.1} parent=1 // pred_region
      %72 = dma.done [#allocation10], 1024
    $region33: #{tpu_custom_call.1} parent=1 // pred_fallthru
      _
    %p74 = scmp.eq.s32.totalorder 0, 0
    // Predicated region
    $region34: #{tpu_custom_call.1} parent=1 // pred_check
      %p75 = pneg %p74
    $region35: #{tpu_custom_call.1} parent=1 // pred_check_branch
      %77 = sbr.rel (%p75) target = $region37
    $region36: #{tpu_custom_call.1} parent=1 // pred_region
      %78 = vst [vmem:[#allocation2] sm:$0xff] 0.0
      %79 = vst [vmem:[#allocation2 + $0x8] sm:$0xff] 0.0
    $region37: #{tpu_custom_call.1} parent=1 // pred_fallthru
      _
    %v80 = vld [vmem:[#allocation3] sm:$0xff]
    %v81 = vld [vmem:[#allocation3 + $0x8] sm:$0xff]
    %v82 = vpack.c.bf16 %v81, %v80
    %v83 = vld [vmem:[#allocation6] sm:$0xf]
    %v84 = vld [vmem:[#allocation6 + $0x4] sm:$0xf]
    %v85 = vld [vmem:[#allocation6 + $0x8] sm:$0xf]
    %v86 = vld [vmem:[#allocation6 + $0xc] sm:$0xf]
    %v87 = vld [vmem:[#allocation6 + $0x10] sm:$0xf]
    %v88 = vld [vmem:[#allocation6 + $0x14] sm:$0xf]
    %v89 = vld [vmem:[#allocation6 + $0x18] sm:$0xf]
    %v90 = vld [vmem:[#allocation6 + $0x1c] sm:$0xf]
    %v91 = vld [vmem:[#allocation6 + $0x20] sm:$0xf]
    %v92 = vld [vmem:[#allocation6 + $0x24] sm:$0xf]
    %v93 = vld [vmem:[#allocation6 + $0x28] sm:$0xf]
    %v94 = vld [vmem:[#allocation6 + $0x2c] sm:$0xf]
    %v95 = vld [vmem:[#allocation6 + $0x30] sm:$0xf]
    %v96 = vld [vmem:[#allocation6 + $0x34] sm:$0xf]
    %v97 = vld [vmem:[#allocation6 + $0x38] sm:$0xf]
    %v98 = vld [vmem:[#allocation6 + $0x3c] sm:$0xf]
    %v115 = vunpack.c.l.b16 %v83
    %v116 = vunpack.c.l.b16 %v84
    %v117 = vunpack.c.l.b16 %v85
    %v118 = vunpack.c.l.b16 %v86
    %v119 = vunpack.c.l.b16 %v87
    %v120 = vunpack.c.l.b16 %v88
    %v121 = vunpack.c.l.b16 %v89
    %v122 = vunpack.c.l.b16 %v90
    %v123 = vunpack.c.l.b16 %v91
    %v124 = vunpack.c.l.b16 %v92
    %v125 = vunpack.c.l.b16 %v93
    %v126 = vunpack.c.l.b16 %v94
    %v127 = vunpack.c.l.b16 %v95
    %v128 = vunpack.c.l.b16 %v96
    %v129 = vunpack.c.l.b16 %v97
    %v130 = vunpack.c.l.b16 %v98
    %v131 = vpack.c.b16 %v116, %v115
    %v132 = vpack.c.b16 %v118, %v117
    %v133 = vpack.c.b16 %v120, %v119
    %v134 = vpack.c.b16 %v122, %v121
    %v135 = vpack.c.b16 %v124, %v123
    %v136 = vpack.c.b16 %v126, %v125
    %v137 = vpack.c.b16 %v128, %v127
    %v138 = vpack.c.b16 %v130, %v129
    %147 = vmatprep.subr.bf16.mxu0 0
    %148 = vmatpush1.bf16.msra.mxu0 %v138
    %149 = vmatprep.subr.bf16.mxu0 0
    %150 = vmatpush1.bf16.msra.mxu0 %v137
    %151 = vmatprep.subr.bf16.mxu0 0
    %152 = vmatpush1.bf16.msra.mxu0 %v136
    %153 = vmatprep.subr.bf16.mxu0 0
    %154 = vmatpush1.bf16.msra.mxu0 %v135
    %155 = vmatprep.subr.bf16.mxu0 0
    %156 = vmatpush1.bf16.msra.mxu0 %v134
    %157 = vmatprep.subr.bf16.mxu0 0
    %158 = vmatpush1.bf16.msra.mxu0 %v133
    %159 = vmatprep.subr.bf16.mxu0 0
    %160 = vmatpush1.bf16.msra.mxu0 %v132
    %161 = vmatprep.subr.bf16.mxu0 0
    %162 = vmatpush1.bf16.msra.mxu0 %v131
    %163 = vmatprep.subr.bf16.mxu0 0
    %164 = vmatpush2.bf16.msra.mxu0 0
    %165 = vmatprep.subr.bf16.mxu0 0
    %166 = vmatpush2.bf16.msra.mxu0 0
    %167 = vmatprep.subr.bf16.mxu0 0
    %168 = vmatpush2.bf16.msra.mxu0 0
    %169 = vmatprep.subr.bf16.mxu0 0
    %170 = vmatpush2.bf16.msra.mxu0 0
    %171 = vmatprep.subr.bf16.mxu0 0
    %172 = vmatpush2.bf16.msra.mxu0 0
    %173 = vmatprep.subr.bf16.mxu0 0
    %174 = vmatpush2.bf16.msra.mxu0 0
    %175 = vmatprep.subr.bf16.mxu0 0
    %176 = vmatpush2.bf16.msra.mxu0 0
    %177 = vmatprep.subr.bf16.mxu0 0
    %178 = vmatpush2.bf16.msra.mxu0 0
    %179 = vmatprep.mubr.bf16.mxu0 0
    %180 = vmatmul.mubr.bf16.gmra.mxu0 %v82
    %v181 = vpop.f32.mrf.mxu0
    %v182 = vadd.f32 0.0, %v181
    %v183 = vpop.f32.mrf.mxu0
    %v184 = vpop.f32.mrf.mxu0
    %v185 = vadd.f32 0.0, %v184
    %v186 = vpop.f32.mrf.mxu0
    %187 = vdwg.mxu0
    %v188 = vld [vmem:[#allocation8] sm:$0xf]
    %v189 = vld [vmem:[#allocation8 + $0x4] sm:$0xf]
    %v190 = vld [vmem:[#allocation8 + $0x8] sm:$0xf]
    %v191 = vld [vmem:[#allocation8 + $0xc] sm:$0xf]
    %v192 = vld [vmem:[#allocation8 + $0x10] sm:$0xf]
    %v193 = vld [vmem:[#allocation8 + $0x14] sm:$0xf]
    %v194 = vld [vmem:[#allocation8 + $0x18] sm:$0xf]
    %v195 = vld [vmem:[#allocation8 + $0x1c] sm:$0xf]
    %v196 = vld [vmem:[#allocation8 + $0x20] sm:$0xf]
    %v197 = vld [vmem:[#allocation8 + $0x24] sm:$0xf]
    %v198 = vld [vmem:[#allocation8 + $0x28] sm:$0xf]
    %v199 = vld [vmem:[#allocation8 + $0x2c] sm:$0xf]
    %v200 = vld [vmem:[#allocation8 + $0x30] sm:$0xf]
    %v201 = vld [vmem:[#allocation8 + $0x34] sm:$0xf]
    %v202 = vld [vmem:[#allocation8 + $0x38] sm:$0xf]
    %v203 = vld [vmem:[#allocation8 + $0x3c] sm:$0xf]
    %v220 = vunpack.c.l.b16 %v188
    %v221 = vunpack.c.l.b16 %v189
    %v222 = vunpack.c.l.b16 %v190
    %v223 = vunpack.c.l.b16 %v191
    %v224 = vunpack.c.l.b16 %v192
    %v225 = vunpack.c.l.b16 %v193
    %v226 = vunpack.c.l.b16 %v194
    %v227 = vunpack.c.l.b16 %v195
    %v228 = vunpack.c.l.b16 %v196
    %v229 = vunpack.c.l.b16 %v197
    %v230 = vunpack.c.l.b16 %v198
    %v231 = vunpack.c.l.b16 %v199
    %v232 = vunpack.c.l.b16 %v200
    %v233 = vunpack.c.l.b16 %v201
    %v234 = vunpack.c.l.b16 %v202
    %v235 = vunpack.c.l.b16 %v203
    %v236 = vpack.c.b16 %v221, %v220
    %v237 = vpack.c.b16 %v223, %v222
    %v238 = vpack.c.b16 %v225, %v224
    %v239 = vpack.c.b16 %v227, %v226
    %v240 = vpack.c.b16 %v229, %v228
    %v241 = vpack.c.b16 %v231, %v230
    %v242 = vpack.c.b16 %v233, %v232
    %v243 = vpack.c.b16 %v235, %v234
    %252 = vmatprep.subr.bf16.mxu0 0
    %253 = vmatpush1.bf16.msra.mxu0 %v243
    %254 = vmatprep.subr.bf16.mxu0 0
    %255 = vmatpush1.bf16.msra.mxu0 %v242
    %256 = vmatprep.subr.bf16.mxu0 0
    %257 = vmatpush1.bf16.msra.mxu0 %v241
    %258 = vmatprep.subr.bf16.mxu0 0
    %259 = vmatpush1.bf16.msra.mxu0 %v240
    %260 = vmatprep.subr.bf16.mxu0 0
    %261 = vmatpush1.bf16.msra.mxu0 %v239
    %262 = vmatprep.subr.bf16.mxu0 0
    %263 = vmatpush1.bf16.msra.mxu0 %v238
    %264 = vmatprep.subr.bf16.mxu0 0
    %265 = vmatpush1.bf16.msra.mxu0 %v237
    %266 = vmatprep.subr.bf16.mxu0 0
    %267 = vmatpush1.bf16.msra.mxu0 %v236
    %268 = vmatprep.subr.bf16.mxu0 0
    %269 = vmatpush2.bf16.msra.mxu0 0
    %270 = vmatprep.subr.bf16.mxu0 0
    %271 = vmatpush2.bf16.msra.mxu0 0
    %272 = vmatprep.subr.bf16.mxu0 0
    %273 = vmatpush2.bf16.msra.mxu0 0
    %274 = vmatprep.subr.bf16.mxu0 0
    %275 = vmatpush2.bf16.msra.mxu0 0
    %276 = vmatprep.subr.bf16.mxu0 0
    %277 = vmatpush2.bf16.msra.mxu0 0
    %278 = vmatprep.subr.bf16.mxu0 0
    %279 = vmatpush2.bf16.msra.mxu0 0
    %280 = vmatprep.subr.bf16.mxu0 0
    %281 = vmatpush2.bf16.msra.mxu0 0
    %282 = vmatprep.subr.bf16.mxu0 0
    %283 = vmatpush2.bf16.msra.mxu0 0
    %284 = vmatprep.mubr.bf16.mxu0 0
    %285 = vmatmul.mubr.bf16.gmra.mxu0 %v82
    %v286 = vpop.f32.mrf.mxu0
    %v287 = vadd.f32 0.0, %v286
    %v288 = vpop.f32.mrf.mxu0
    %v289 = vpop.f32.mrf.mxu0
    %v290 = vadd.f32 0.0, %v289
    %v291 = vpop.f32.mrf.mxu0
    %292 = vdwg.mxu0
    %v293 = vxor.u32 %v182, 2147483648
    %v294 = vxor.u32 %v185, 2147483648
    %v295 = vmul.f32 %v293, 1.442695
    %v296 = vpow.pop %v295
    %v297 = vmul.f32 %v294, 1.442695
    %v298 = vpow.pop %v297
    %v299 = vadd.f32 %v296, 1.0
    %v300 = vadd.f32 %v298, 1.0
    %v301 = vrcp.pop %v299
    %v302 = vmul.f32 1.0, %v301
    %v303 = vrcp.pop %v300
    %v304 = vmul.f32 1.0, %v303
    %v305 = vmul.f32 %v182, %v302
    %v306 = vmul.f32 %v185, %v304
    %v307 = vmul.f32 %v305, %v287
    %v308 = vmul.f32 %v306, %v290
    %v309 = vld [vmem:[#allocation2] sm:$0xff]
    %v310 = vld [vmem:[#allocation2 + $0x8] sm:$0xff]
    %v311 = vpack.c.bf16 %v308, %v307
    %v312 = vld [vmem:[#allocation9] sm:$0xf]
    %v313 = vld [vmem:[#allocation9 + $0x4] sm:$0xf]
    %v314 = vld [vmem:[#allocation9 + $0x8] sm:$0xf]
    %v315 = vld [vmem:[#allocation9 + $0xc] sm:$0xf]
    %v316 = vld [vmem:[#allocation9 + $0x10] sm:$0xf]
    %v317 = vld [vmem:[#allocation9 + $0x14] sm:$0xf]
    %v318 = vld [vmem:[#allocation9 + $0x18] sm:$0xf]
    %v319 = vld [vmem:[#allocation9 + $0x1c] sm:$0xf]
    %v320 = vld [vmem:[#allocation9 + $0x20] sm:$0xf]
    %v321 = vld [vmem:[#allocation9 + $0x24] sm:$0xf]
    %v322 = vld [vmem:[#allocation9 + $0x28] sm:$0xf]
    %v323 = vld [vmem:[#allocation9 + $0x2c] sm:$0xf]
    %v324 = vld [vmem:[#allocation9 + $0x30] sm:$0xf]
    %v325 = vld [vmem:[#allocation9 + $0x34] sm:$0xf]
    %v326 = vld [vmem:[#allocation9 + $0x38] sm:$0xf]
    %v327 = vld [vmem:[#allocation9 + $0x3c] sm:$0xf]
    %v344 = vunpack.c.l.b16 %v312
    %v345 = vunpack.c.l.b16 %v313
    %v346 = vunpack.c.l.b16 %v314
    %v347 = vunpack.c.l.b16 %v315
    %v348 = vunpack.c.l.b16 %v316
    %v349 = vunpack.c.l.b16 %v317
    %v350 = vunpack.c.l.b16 %v318
    %v351 = vunpack.c.l.b16 %v319
    %v352 = vunpack.c.l.b16 %v320
    %v353 = vunpack.c.l.b16 %v321
    %v354 = vunpack.c.l.b16 %v322
    %v355 = vunpack.c.l.b16 %v323
    %v356 = vunpack.c.l.b16 %v324
    %v357 = vunpack.c.l.b16 %v325
    %v358 = vunpack.c.l.b16 %v326
    %v359 = vunpack.c.l.b16 %v327
    %v360 = vpack.c.b16 %v345, %v344
    %v361 = vpack.c.b16 %v347, %v346
    %v362 = vpack.c.b16 %v349, %v348
    %v363 = vpack.c.b16 %v351, %v350
    %v364 = vpack.c.b16 %v353, %v352
    %v365 = vpack.c.b16 %v355, %v354
    %v366 = vpack.c.b16 %v357, %v356
    %v367 = vpack.c.b16 %v359, %v358
    %376 = vmatprep.subr.bf16.mxu0 0
    %377 = vmatpush1.bf16.msra.mxu0 %v367
    %378 = vmatprep.subr.bf16.mxu0 0
    %379 = vmatpush1.bf16.msra.mxu0 %v366
    %380 = vmatprep.subr.bf16.mxu0 0
    %381 = vmatpush1.bf16.msra.mxu0 %v365
    %382 = vmatprep.subr.bf16.mxu0 0
    %383 = vmatpush1.bf16.msra.mxu0 %v364
    %384 = vmatprep.subr.bf16.mxu0 0
    %385 = vmatpush1.bf16.msra.mxu0 %v363
    %386 = vmatprep.subr.bf16.mxu0 0
    %387 = vmatpush1.bf16.msra.mxu0 %v362
    %388 = vmatprep.subr.bf16.mxu0 0
    %389 = vmatpush1.bf16.msra.mxu0 %v361
    %390 = vmatprep.subr.bf16.mxu0 0
    %391 = vmatpush1.bf16.msra.mxu0 %v360
    %392 = vmatprep.subr.bf16.mxu0 0
    %393 = vmatpush2.bf16.msra.mxu0 0
    %394 = vmatprep.subr.bf16.mxu0 0
    %395 = vmatpush2.bf16.msra.mxu0 0
    %396 = vmatprep.subr.bf16.mxu0 0
    %397 = vmatpush2.bf16.msra.mxu0 0
    %398 = vmatprep.subr.bf16.mxu0 0
    %399 = vmatpush2.bf16.msra.mxu0 0
    %400 = vmatprep.subr.bf16.mxu0 0
    %401 = vmatpush2.bf16.msra.mxu0 0
    %402 = vmatprep.subr.bf16.mxu0 0
    %403 = vmatpush2.bf16.msra.mxu0 0
    %404 = vmatprep.subr.bf16.mxu0 0
    %405 = vmatpush2.bf16.msra.mxu0 0
    %406 = vmatprep.subr.bf16.mxu0 0
    %407 = vmatpush2.bf16.msra.mxu0 0
    %408 = vmatprep.mubr.bf16.mxu0 0
    %409 = vmatmul.mubr.bf16.gmra.mxu0 %v311
    %v410 = vpop.f32.mrf.mxu0
    %v411 = vadd.f32 0.0, %v410
    %v412 = vpop.f32.mrf.mxu0
    %v413 = vpop.f32.mrf.mxu0
    %v414 = vadd.f32 0.0, %v413
    %v415 = vpop.f32.mrf.mxu0
    %416 = vdwg.mxu0
    %v417 = vadd.f32 %v309, %v411
    %v418 = vadd.f32 %v310, %v414
    %419 = vst [vmem:[#allocation2] sm:$0xff] %v417
    %420 = vst [vmem:[#allocation2 + $0x8] sm:$0xff] %v418
    // Predicated region
    $region38: #{tpu_custom_call.1} parent=1 // pred_check
      %p421 = pneg %p74
    $region39: #{tpu_custom_call.1} parent=1 // pred_check_branch
      %423 = sbr.rel (%p421) target = $region41
    $region40: #{tpu_custom_call.1} parent=1 // pred_region
      %v424 = vld [vmem:[#allocation2] sm:$0xff]
      %v425 = vld [vmem:[#allocation2 + $0x8] sm:$0xff]
      %v426 = vpack.c.bf16 %v425, %v424
      %v428 = vunpack.c.l.b16 %v426
      %v429 = vunpack.c.h.b16 %v426
      %v430 = vpack.c.b16 %v428, %v428
      %v431 = vpack.c.b16 %v429, %v429
      %434 = vst [vmem:[#allocation11] sm:$0xf] %v430
      %435 = vst [vmem:[#allocation11 + $0x4] sm:$0xf] %v431
    $region41: #{tpu_custom_call.1} parent=1 // pred_fallthru
      _
    // Predicated region
    $region42: #{tpu_custom_call.1} parent=1 // pred_check
      _
    $region43: #{tpu_custom_call.1} parent=1 // pred_check_branch
      %437 = sbr.rel (0) target = $region45
    $region44: #{tpu_custom_call.1} parent=1 // pred_region
      %s439 = ssub.s32 128, 128
      %440 = vsyncadd [#allocation5], %s439
      %s441 = sshll.u32 [#allocation11], 4
      %s442 = int_to_ptr.vmem [resolvable:$true] %s441
      %447 = dma.vmem_to_hbm [thread:$0]  %s442, 128, %s4, [#allocation5], 64, 64, 4
    $region45: #{tpu_custom_call.1} parent=1 // pred_fallthru
      _
    // Predicated region
    $region46: #{tpu_custom_call.1} parent=1 // pred_check
      _
    $region47: #{tpu_custom_call.1} parent=1 // pred_check_branch
      %449 = sbr.rel (0) target = $region49
    $region48: #{tpu_custom_call.1} parent=1 // pred_region
      %450 = dma.done [#allocation5], 128
    $region49: #{tpu_custom_call.1} parent=1 // pred_fallthru
      _
    %451 = vsyncpa [#allocation4], 1
    %452 = vsyncpa [#allocation7], 1
    %453 = vsyncpa [#allocation10], 1
    %454 = vsyncpa [#allocation5], 1

</llo_original>
